<compile_context>
chip_gen: v7x
topology: tpu7x:2x2x1
jax: 0.10.0
libtpu: 0.0.40
codegen_flags: <defaults>
</compile_context>

<pallas_src>
import jax
import jax.numpy as jnp
from jax.experimental import pallas as pl
from jax.experimental.pallas import tpu as pltpu

LN_EPS = 1e-12


def _choose_tq(S: int) -> int:
    """Query-row tile. Full S for small sequences, else 256 (pass tq=128 on v5e,
    whose MXU is 4x128x128 and whose default scoped VMEM is smaller)."""
    if S <= 256:
        return S
    return 256


def _default_vmem_limit() -> int:
    """Generation-aware scoped-VMEM limit."""
    cap = 128 * 1024 * 1024
    try:
        cap = pltpu.get_tpu_info().vmem_capacity_bytes
    except Exception:
        pass
    if cap <= 64 * 1024 * 1024:
        # v7x (64 MiB physical): leave headroom for internal scratch / semaphores.
        return int(cap * 0.72)
    # v5e / v6e: 128 MiB physical.
    return 64 * 1024 * 1024


def _bert_translation_attention_kernel(
    hid_ref,      # (1, S, H)  f32   full-sequence hidden states for this batch elem
    tm_ref,       # (1, TQ, S) bf16  pre-masked translation-matrix query tile
    wv_ref,       # (H, H)     bf16  transValue weight, pre-transposed (x @ wv)
    wd_ref,       # (H, H)     bf16  output.dense weight, pre-transposed (x @ wd)
    consts_ref,   # (4, H)     f32   rows: bv, bd, ln_gamma, ln_beta
    out_ref,      # (1, TQ, H)       output tile
):
    q = pl.program_id(1)
    tq = out_ref.shape[1]
    start = pl.multiple_of(q * tq, tq)

    tm = tm_ref[0]                                             # (TQ, S) bf16 (pre-masked)
    hid_bf16 = hid_ref[0].astype(jnp.bfloat16)                 # (S, H)

    # Re-associated value projection (same FLOPs, no carried scratch):
    #   ta = masked_tm @ (hid @ Wv^T + bv)
    #      = (masked_tm @ hid) @ Wv^T + rowsum(masked_tm) * bv
    th = jnp.dot(tm, hid_bf16, preferred_element_type=jnp.float32)        # (TQ, H) f32
    rs = jnp.sum(tm.astype(jnp.float32), axis=-1, keepdims=True)          # (TQ, 1) f32
    ta = jnp.dot(th.astype(jnp.bfloat16), wv_ref[...],
                 preferred_element_type=jnp.float32) + rs * consts_ref[0:1, :]

    # BertSelfOutput.dense (dropout = identity in eval mode).
    d = jnp.dot(ta.astype(jnp.bfloat16), wd_ref[...],
                preferred_element_type=jnp.float32) + consts_ref[1:2, :]

    # Residual add + LayerNorm over hidden dim, all f32.
    # Residual tile sliced from the already-resident full-seq hidden block.
    x = d + hid_ref[0, pl.ds(start, tq), :]
    mean = jnp.mean(x, axis=-1, keepdims=True)
    cen = x - mean
    var = jnp.mean(cen * cen, axis=-1, keepdims=True)
    y = cen * jax.lax.rsqrt(var + LN_EPS)
    out_ref[0] = (y * consts_ref[2:3, :] + consts_ref[3:4, :]).astype(out_ref.dtype)


def prepare_params(params):
    """One-time parameter prep: transpose + bf16-cast weights, pack small constants."""
    H = params["wv"].shape[0]
    consts = jnp.stack(
        [
            params["bv"].reshape(H),
            params["bd"].reshape(H),
            params["ln_gamma"].reshape(H),
            params["ln_beta"].reshape(H),
        ],
        axis=0,
    ).astype(jnp.float32)                                      # (4, H)
    return {
        "wv_t": params["wv"].T.astype(jnp.bfloat16),           # x @ wv_t == x @ Wv.T
        "wd_t": params["wd"].T.astype(jnp.bfloat16),
        "consts": consts,
    }


def prepare_translation(translation_matrix, attention_mask, dtype=jnp.bfloat16):
    """One-time per-forward prep shared across ALL BERT layers:
    masked_fill(translation_matrix, attention_mask.squeeze(1) < 0, 0) cast to bf16."""
    mask = jnp.squeeze(attention_mask, axis=1)                 # (B, S, S)
    return jnp.where(mask < 0, 0.0, translation_matrix).astype(dtype)


def bert_translation_attention(hidden_states, masked_tm, prepared, *,
                               tq=None, tm_buffers=2, out_dtype=jnp.float32,
                               vmem_limit_bytes=None):
    """hidden_states: [B,S,H] f32; masked_tm: [B,S,S] bf16 (from prepare_translation);
    prepared = prepare_params(...)."""
    B, S, H = hidden_states.shape
    assert masked_tm.shape == (B, S, S)
    if masked_tm.dtype != jnp.bfloat16:
        masked_tm = masked_tm.astype(jnp.bfloat16)

    if tq is None:
        tq = _choose_tq(S)
    # Pad S to a multiple of the query tile (fixes the old full-S fallback path).
    S_pad = -(-S // tq) * tq
    if S_pad != S:
        pad = S_pad - S
        hidden_states = jnp.pad(hidden_states, ((0, 0), (0, pad), (0, 0)))
        masked_tm = jnp.pad(masked_tm, ((0, 0), (0, pad), (0, pad)))
    n_q = S_pad // tq

    if vmem_limit_bytes is None:
        vmem_limit_bytes = _default_vmem_limit()

    invariant = pl.Buffered(1)   # grid-invariant / batch-only blocks: no double buffer
    grid_spec = pltpu.PrefetchScalarGridSpec(
        num_scalar_prefetch=0,
        grid=(B, n_q),
        in_specs=[
            # Full-sequence hidden block; index map depends only on b, so it is DMA'd
            # once per batch element and reused across all query tiles.
            pl.BlockSpec((1, S_pad, H), lambda b, q: (b, 0, 0),
                         pipeline_mode=invariant),
            # Streamed pre-masked bf16 translation-matrix tiles (the dominant stream).
            pl.BlockSpec((1, tq, S_pad), lambda b, q: (b, q, 0),
                         pipeline_mode=pl.Buffered(tm_buffers)),
            pl.BlockSpec((H, H), lambda b, q: (0, 0), pipeline_mode=invariant),  # wv^T
            pl.BlockSpec((H, H), lambda b, q: (0, 0), pipeline_mode=invariant),  # wd^T
            pl.BlockSpec((4, H), lambda b, q: (0, 0), pipeline_mode=invariant),  # consts
        ],
        out_specs=pl.BlockSpec((1, tq, H), lambda b, q: (b, q, 0)),
    )

    out = pl.pallas_call(
        _bert_translation_attention_kernel,
        out_shape=jax.ShapeDtypeStruct((B, S_pad, H), out_dtype),
        grid_spec=grid_spec,
        compiler_params=pltpu.CompilerParams(
            # No cross-q carry anymore -> both axes parallel (megacore / v7x 2 TCs).
            dimension_semantics=("parallel", "parallel"),
            vmem_limit_bytes=vmem_limit_bytes,
        ),
    )(hidden_states, masked_tm, prepared["wv_t"], prepared["wd_t"], prepared["consts"])

    if S_pad != S:
        out = out[:, :S, :]
    return out


def _reference(hidden_states, translation_matrix, attention_mask, params):
    mask = jnp.squeeze(attention_mask, axis=1)
    masked_tm = jnp.where(mask < 0, 0.0, translation_matrix)
    v = hidden_states @ params["wv"].T + params["bv"]
    ta = jnp.einsum("bqs,bsh->bqh", masked_tm, v)
    d = ta @ params["wd"].T + params["bd"]
    x = d + hidden_states
    mean = jnp.mean(x, axis=-1, keepdims=True)
    var = jnp.mean((x - mean) ** 2, axis=-1, keepdims=True)
    y = (x - mean) / jnp.sqrt(var + LN_EPS)
    return y * params["ln_gamma"] + params["ln_beta"]


if __name__ == "__main__":
    def run_case(B, S, H):
        key = jax.random.PRNGKey(0)
        k_h, k_tm, k_m, k_wv, k_bv, k_wd, k_bd = jax.random.split(key, 7)

        hidden_states = jax.random.normal(k_h, (B, S, H), dtype=jnp.float32)
        translation_matrix = jax.random.normal(k_tm, (B, S, S), dtype=jnp.float32)
        # HF-style additive mask: 0 where attended, -10000 where masked.
        mask_bits = jax.random.bernoulli(k_m, p=0.3, shape=(B, 1, S, S))
        attention_mask = jnp.where(mask_bits, -10000.0, 0.0).astype(jnp.float32)

        params = {
            "wv": 0.02 * jax.random.normal(k_wv, (H, H), dtype=jnp.float32),
            "bv": 0.01 * jax.random.normal(k_bv, (H,), dtype=jnp.float32),
            "wd": 0.02 * jax.random.normal(k_wd, (H, H), dtype=jnp.float32),
            "bd": 0.01 * jax.random.normal(k_bd, (H,), dtype=jnp.float32),
            "ln_gamma": jnp.ones((H,), dtype=jnp.float32),
            "ln_beta": jnp.zeros((H,), dtype=jnp.float32),
        }

        prepared = prepare_params(params)
        masked_tm = prepare_translation(translation_matrix, attention_mask)

        out = bert_translation_attention(hidden_states, masked_tm, prepared)
        out = jax.block_until_ready(out)

        ref = _reference(hidden_states, translation_matrix, attention_mask, params)
        assert out.shape == (B, S, H)
        # bf16 MXU operands -> slightly looser tolerance than a pure-f32 version.
        assert jnp.allclose(out, ref, atol=2e-2, rtol=2e-2), \
            f"mismatch vs reference at B={B} S={S} H={H}"

    run_case(2, 8, 32)      # tiny smoke test (full-array blocks)
    run_case(1, 320, 128)   # exercises TQ=256 tiling + tail padding path

    print("KERNEL_OK")
</pallas_src>

<mosaic_0001>
module attributes {stable_mosaic.version = 11 : i64} {
  func.func @_bert_translation_attention_kernel(%arg0: i32, %arg1: i32, %arg2: memref<1x8x32xf32, #tpu.memory_space<vmem>>, %arg3: memref<1x8x8xbf16, #tpu.memory_space<vmem>>, %arg4: memref<32x32xbf16, #tpu.memory_space<vmem>>, %arg5: memref<32x32xbf16, #tpu.memory_space<vmem>>, %arg6: memref<4x32xf32, #tpu.memory_space<vmem>>, %arg7: memref<1x8x32xf32, #tpu.memory_space<vmem>>) attributes {dimension_semantics = [#tpu.dimension_semantics<parallel>, #tpu.dimension_semantics<parallel>], iteration_bounds = array<i64: 2, 1>, scalar_prefetch = 0 : i64, scratch_operands = 0 : i64, tpu.core_type = #tpu.core_type<tc>, window_params = [{pipeline_mode = #tpu.pipeline_mode<synchronous>, transform_indices = @transform_0, window_bounds = array<i64: 1, 8, 32>}, {pipeline_mode = #tpu.pipeline_mode<double_buffered>, transform_indices = @transform_1, window_bounds = array<i64: 1, 8, 8>}, {pipeline_mode = #tpu.pipeline_mode<synchronous>, transform_indices = @transform_2, window_bounds = array<i64: 32, 32>}, {pipeline_mode = #tpu.pipeline_mode<synchronous>, transform_indices = @transform_3, window_bounds = array<i64: 32, 32>}, {pipeline_mode = #tpu.pipeline_mode<synchronous>, transform_indices = @transform_4, window_bounds = array<i64: 4, 32>}, {transform_indices = @transform_5, window_bounds = array<i64: 1, 8, 32>}]} {
    %c8_i32 = arith.constant 8 : i32
    %0 = arith.muli %arg1, %c8_i32 : i32
    %1 = tpu.assume_multiple %0, 8 : i32
    %c0 = arith.constant 0 : index
    %c0_0 = arith.constant 0 : index
    %c0_1 = arith.constant 0 : index
    %2 = vector.load %arg3[%c0, %c0_0, %c0_1] : memref<1x8x8xbf16, #tpu.memory_space<vmem>>, vector<1x8x8xbf16>
    %3 = vector.shape_cast %2 : vector<1x8x8xbf16> to vector<8x8xbf16>
    %c0_2 = arith.constant 0 : index
    %c0_3 = arith.constant 0 : index
    %c0_4 = arith.constant 0 : index
    %4 = vector.load %arg2[%c0_2, %c0_3, %c0_4] : memref<1x8x32xf32, #tpu.memory_space<vmem>>, vector<1x8x32xf32>
    %5 = vector.shape_cast %4 : vector<1x8x32xf32> to vector<8x32xf32>
    %6 = arith.truncf %5 : vector<8x32xf32> to vector<8x32xbf16>
    %cst = arith.constant dense<0.000000e+00> : vector<8x32xf32>
    %7 = tpu.matmul %3, %6, %cst {dimension_numbers = #tpu.dot_dimension_numbers<[1], [0], [0], [1], [0, 0, 1, 1], [], []>} : vector<8x8xbf16>, vector<8x32xbf16>, vector<8x32xf32> -> vector<8x32xf32>
    %8 = arith.extf %3 : vector<8x8xbf16> to vector<8x8xf32>
    %cst_5 = arith.constant dense<0.000000e+00> : vector<8xf32>
    %9 = vector.multi_reduction <add>, %8, %cst_5 [1] : vector<8x8xf32> to vector<8xf32>
    %10 = vector.shape_cast %9 : vector<8xf32> to vector<8x1xf32>
    %11 = arith.truncf %7 : vector<8x32xf32> to vector<8x32xbf16>
    %c0_6 = arith.constant 0 : index
    %c0_7 = arith.constant 0 : index
    %12 = vector.load %arg4[%c0_6, %c0_7] : memref<32x32xbf16, #tpu.memory_space<vmem>>, vector<32x32xbf16>
    %cst_8 = arith.constant dense<0.000000e+00> : vector<8x32xf32>
    %13 = tpu.matmul %11, %12, %cst_8 {dimension_numbers = #tpu.dot_dimension_numbers<[1], [0], [0], [1], [0, 0, 1, 1], [], []>} : vector<8x32xbf16>, vector<32x32xbf16>, vector<8x32xf32> -> vector<8x32xf32>
    %c0_9 = arith.constant 0 : index
    %c0_10 = arith.constant 0 : index
    %14 = vector.load %arg6[%c0_9, %c0_10] : memref<4x32xf32, #tpu.memory_space<vmem>>, vector<1x32xf32>
    %15 = vector.broadcast %10 : vector<8x1xf32> to vector<8x32xf32>
    %16 = vector.broadcast %14 : vector<1x32xf32> to vector<8x32xf32>
    %17 = arith.mulf %15, %16 : vector<8x32xf32>
    %18 = arith.addf %13, %17 : vector<8x32xf32>
    %19 = arith.truncf %18 : vector<8x32xf32> to vector<8x32xbf16>
    %c0_11 = arith.constant 0 : index
    %c0_12 = arith.constant 0 : index
    %20 = vector.load %arg5[%c0_11, %c0_12] : memref<32x32xbf16, #tpu.memory_space<vmem>>, vector<32x32xbf16>
    %cst_13 = arith.constant dense<0.000000e+00> : vector<8x32xf32>
    %21 = tpu.matmul %19, %20, %cst_13 {dimension_numbers = #tpu.dot_dimension_numbers<[1], [0], [0], [1], [0, 0, 1, 1], [], []>} : vector<8x32xbf16>, vector<32x32xbf16>, vector<8x32xf32> -> vector<8x32xf32>
    %c1 = arith.constant 1 : index
    %c0_14 = arith.constant 0 : index
    %22 = vector.load %arg6[%c1, %c0_14] : memref<4x32xf32, #tpu.memory_space<vmem>>, vector<1x32xf32>
    %23 = vector.broadcast %22 : vector<1x32xf32> to vector<8x32xf32>
    %24 = arith.addf %21, %23 : vector<8x32xf32>
    %c0_15 = arith.constant 0 : index
    %25 = arith.index_cast %1 : i32 to index
    %c0_16 = arith.constant 0 : index
    %26 = vector.load %arg2[%c0_15, %25, %c0_16] : memref<1x8x32xf32, #tpu.memory_space<vmem>>, vector<1x8x32xf32>
    %27 = vector.shape_cast %26 : vector<1x8x32xf32> to vector<8x32xf32>
    %28 = arith.addf %24, %27 : vector<8x32xf32>
    %cst_17 = arith.constant dense<0.000000e+00> : vector<8xf32>
    %29 = vector.multi_reduction <add>, %28, %cst_17 [1] : vector<8x32xf32> to vector<8xf32>
    %30 = vector.shape_cast %29 : vector<8xf32> to vector<8x1xf32>
    %cst_18 = arith.constant 3.200000e+01 : f32
    %31 = vector.broadcast %cst_18 : f32 to vector<8x1xf32>
    %32 = arith.divf %30, %31 : vector<8x1xf32>
    %33 = vector.broadcast %32 : vector<8x1xf32> to vector<8x32xf32>
    %34 = arith.subf %28, %33 : vector<8x32xf32>
    %35 = arith.mulf %34, %34 : vector<8x32xf32>
    %cst_19 = arith.constant dense<0.000000e+00> : vector<8xf32>
    %36 = vector.multi_reduction <add>, %35, %cst_19 [1] : vector<8x32xf32> to vector<8xf32>
    %37 = vector.shape_cast %36 : vector<8xf32> to vector<8x1xf32>
    %cst_20 = arith.constant 3.200000e+01 : f32
    %38 = vector.broadcast %cst_20 : f32 to vector<8x1xf32>
    %39 = arith.divf %37, %38 : vector<8x1xf32>
    %cst_21 = arith.constant 9.99999996E-13 : f32
    %40 = vector.broadcast %cst_21 : f32 to vector<8x1xf32>
    %41 = arith.addf %39, %40 : vector<8x1xf32>
    %42 = math.rsqrt %41 : vector<8x1xf32>
    %43 = vector.broadcast %42 : vector<8x1xf32> to vector<8x32xf32>
    %44 = arith.mulf %34, %43 : vector<8x32xf32>
    %c2 = arith.constant 2 : index
    %c0_22 = arith.constant 0 : index
    %45 = vector.load %arg6[%c2, %c0_22] : memref<4x32xf32, #tpu.memory_space<vmem>>, vector<1x32xf32>
    %46 = vector.broadcast %45 : vector<1x32xf32> to vector<8x32xf32>
    %47 = arith.mulf %44, %46 : vector<8x32xf32>
    %c3 = arith.constant 3 : index
    %c0_23 = arith.constant 0 : index
    %48 = vector.load %arg6[%c3, %c0_23] : memref<4x32xf32, #tpu.memory_space<vmem>>, vector<1x32xf32>
    %49 = vector.broadcast %48 : vector<1x32xf32> to vector<8x32xf32>
    %50 = arith.addf %47, %49 : vector<8x32xf32>
    %c0_24 = arith.constant 0 : index
    %c0_25 = arith.constant 0 : index
    %c0_26 = arith.constant 0 : index
    %51 = vector.load %arg7[%c0_24, %c0_25, %c0_26] : memref<1x8x32xf32, #tpu.memory_space<vmem>>, vector<1x8x32xf32>
    %52 = vector.shape_cast %51 : vector<1x8x32xf32> to vector<8x32xf32>
    %53 = vector.shape_cast %50 : vector<8x32xf32> to vector<1x8x32xf32>
    tpu.vector_store %arg7[%c0_24, %c0_25, %c0_26], %53 {strides = array<i32>} : memref<1x8x32xf32, #tpu.memory_space<vmem>>, vector<1x8x32xf32>,
    return
  }
  func.func @transform_0(%arg0: i32, %arg1: i32) -> (i32, i32, i32) {
    %c0_i32 = arith.constant 0 : i32
    %c0_i32_0 = arith.constant 0 : i32
    %c0_i32_1 = arith.constant 0 : i32
    return %arg0, %c0_i32, %c0_i32_0 : i32, i32, i32
  }
  func.func @transform_1(%arg0: i32, %arg1: i32) -> (i32, i32, i32) {
    %c0_i32 = arith.constant 0 : i32
    %c0_i32_0 = arith.constant 0 : i32
    return %arg0, %arg1, %c0_i32 : i32, i32, i32
  }
  func.func @transform_2(%arg0: i32, %arg1: i32) -> (i32, i32) {
    %c0_i32 = arith.constant 0 : i32
    %c0_i32_0 = arith.constant 0 : i32
    %c0_i32_1 = arith.constant 0 : i32
    return %c0_i32, %c0_i32_0 : i32, i32
  }
  func.func @transform_3(%arg0: i32, %arg1: i32) -> (i32, i32) {
    %c0_i32 = arith.constant 0 : i32
    %c0_i32_0 = arith.constant 0 : i32
    %c0_i32_1 = arith.constant 0 : i32
    return %c0_i32, %c0_i32_0 : i32, i32
  }
  func.func @transform_4(%arg0: i32, %arg1: i32) -> (i32, i32) {
    %c0_i32 = arith.constant 0 : i32
    %c0_i32_0 = arith.constant 0 : i32
    %c0_i32_1 = arith.constant 0 : i32
    return %c0_i32, %c0_i32_0 : i32, i32
  }
  func.func @transform_5(%arg0: i32, %arg1: i32) -> (i32, i32, i32) {
    %c0_i32 = arith.constant 0 : i32
    %c0_i32_0 = arith.constant 0 : i32
    return %arg0, %arg1, %c0_i32 : i32, i32, i32
  }
}

</mosaic_0001>

<llo_original>
// kernel: tpu_custom_call.1
$region0: #{tpu_custom_call.1}
  #allocation0 [shape = 'u32[]', space=smem, size = 0x4, offset = 0x4, fixed_abs, tag = 'smem constant byte address 0x4 - core index']
  #allocation1 [shape = 'u32[144,128]{1,0:T(1,128)}', space=vmem, size = 0x12000, scoped, tag = 'internal scratch']
  %s0 = inlined_call_operand.hbm [shape: f32[2,8,32], index: 0, kind: input, shape index: {}]
  %s1 = inlined_call_operand.hbm [shape: bf16[2,8,8], index: 1, kind: input, shape index: {}]
  %s2 = inlined_call_operand.hbm [shape: bf16[32,32], index: 2, kind: input, shape index: {}]
  %s3 = inlined_call_operand.hbm [shape: bf16[32,32], index: 3, kind: input, shape index: {}]
  %s4 = inlined_call_operand.hbm [shape: f32[4,32], index: 4, kind: input, shape index: {}]
  %s5 = inlined_call_operand.hbm [shape: f32[2,8,32], index: 5, kind: output, shape index: {}]
  %s6 = sld [smem:[#allocation0]]
  $region73: #{tpu_custom_call.1} parent=0
    _
  %s8 = ssub.s32 1, %s6
  %s9 = scalar_select 0, %s8, %s6
  $region1: #{tpu_custom_call.1} parent=0
    #allocation2 [shape = 'u8[4096]{0}', space=vmem, size = 0x1000, scoped, tag = 'input window, operand 0, single buffered']
    #allocation3 [shape = 's32[2]{0}', space=sflag, size = 0x8, scoped, tag = 'scoped memory for tpu_custom_call.1']
    #allocation4 [shape = 's32[2]{0}', space=sflag, size = 0x8, scoped, tag = 'scoped memory for tpu_custom_call.1']
    #allocation5 [shape = 'u8[4096]{0}', space=vmem, size = 0x1000, scoped, tag = 'input window, operand 1']
    #allocation6 [shape = 's32[2]{0}', space=sflag, size = 0x8, scoped, tag = 'scoped memory for tpu_custom_call.1']
    #allocation7 [shape = 'u8[8192]{0}', space=vmem, size = 0x2000, scoped, tag = 'input window, operand 2, single buffered']
    #allocation8 [shape = 'u8[8192]{0}', space=vmem, size = 0x2000, scoped, tag = 'input window, operand 3, single buffered']
    #allocation9 [shape = 's32[1]{0}', space=sflag, size = 0x4, scoped, tag = 'scoped memory for tpu_custom_call.1']
    #allocation10 [shape = 'u8[2048]{0}', space=vmem, size = 0x800, scoped, tag = 'input window, operand 4, single buffered']
    #allocation11 [shape = 'u8[8192]{0}', space=vmem, size = 0x2000, scoped, tag = 'output window, operand 0']
    %10 = vsyncpa [#allocation3], 0
    %11 = vsyncpa [#allocation6], 0
    %s12 = scalar_lea.sflag [#allocation6], 1
    %13 = vsyncpa %s12, 0
    %14 = vsyncpa [#allocation9], 0
    %15 = vsyncpa [#allocation4], 0
    %s16 = scalar_lea.sflag [#allocation4], 1
    %17 = vsyncpa %s16, 0
    loop: start=0, step=1, limit=4
    $region2: #{tpu_custom_call.1} parent=1 // loop_pre_header
      _
    $region3: #{tpu_custom_call.1} parent=1 // loop_header
      %s19 = sphi 0, %s23
      %p20 = scmp.ge.s32.totalorder %s19, 4
      %s26 = sphi 0, %s38
      %s27 = sphi 0, %s34
      %s28 = sphi 0, %s26
      %s29 = sphi 0, %s27
      %s30 = sphi 0, %s28
      %s31 = sphi 0, %s29
      %s41 = sphi 0, %s43
      %s44 = sphi 0, %s41
      %s45 = sphi 0, %s44
      %s61 = sphi 0, %s45
      %s69 = sphi 0, %s71
      %s72 = sphi 0, %s69
      %s73 = sphi 0, %s72
      %s89 = sphi 0, %s73
      %s93 = sphi 0, %s93
      %s95 = sphi 0, %s93
      %s96 = sphi 0, %s95
      %s110 = sphi 0, %s96
      %s114 = sphi 0, %s114
      %s116 = sphi 0, %s114
      %s117 = sphi 0, %s116
      %s131 = sphi 0, %s117
      %s135 = sphi 0, %s135
      %s137 = sphi 0, %s135
      %s138 = sphi 0, %s137
      %s152 = sphi 0, %s138
      %s160 = sphi 0, %s162
      %s163 = sphi 0, %s160
      %s164 = sphi 0, %s163
      %s180 = sphi 0, %s164
    $region4: #{tpu_custom_call.1} parent=1 // loop_header_branch
      %22 = sbr.rel (%p20) target = $region8
    $region5: #{tpu_custom_call.1} parent=1 // loop_body
      %s24 = ssub.s32 %s19, 1
      %s25 = ssub.s32 %s19, 2
      %s32 = sadd.s32 1, %s27
      %p33 = scmp.ge.s32.totalorder %s32, 1
      %s34 = scalar_select %p33, 0, %s32
      %s35 = sadd.s32 1, %s26
      %s36 = scalar_select %p33, %s35, %s26
      %p37 = scmp.ge.s32.totalorder %s36, 2
      %s38 = scalar_select %p37, 0, %s36
      %s39 = ssub.s32 %s26, %s38
      %p40 = scmp.eq.s32.totalorder %s39, 0
      %s42 = sadd.s32 %s41, 1
      %s43 = scalar_select %p40, %s41, %s42
      %p46 = pneg %p40
      %p47 = scmp.eq.s32.totalorder %s19, 1
      %p48 = por %p46, %p47
      %p49 = scmp.ne.s32.totalorder %s41, %s44
      %p50 = scmp.eq.s32.totalorder %s19, 0
      %p51 = por %p49, %p50
      %p52 = scmp.ne.s32.totalorder %s41, %s44
      %p53 = scmp.eq.s32.totalorder %s24, 1
      %p54 = por %p52, %p53
      %p55 = scmp.ne.s32.totalorder %s44, %s45
      %p56 = scmp.eq.s32.totalorder %s24, 0
      %p57 = por %p55, %p56
      %p58 = scmp.ne.s32.totalorder %s44, %s45
      %p59 = scmp.eq.s32.totalorder %s25, 1
      %p60 = por %p58, %p59
      %p62 = scmp.ne.s32.totalorder %s45, %s61
      %p63 = scmp.eq.s32.totalorder %s25, 0
      %p64 = por %p62, %p63
      %s65 = ssub.s32 %s26, %s38
      %s66 = ssub.s32 %s27, %s34
      %s67 = sor.u32 %s65, %s66
      %p68 = scmp.eq.s32.totalorder %s67, 0
      %s70 = sadd.s32 %s69, 1
      %s71 = scalar_select %p68, %s69, %s70
      %p74 = pneg %p68
      %p75 = scmp.eq.s32.totalorder %s19, 1
      %p76 = por %p74, %p75
      %p77 = scmp.ne.s32.totalorder %s69, %s72
      %p78 = scmp.eq.s32.totalorder %s19, 0
      %p79 = por %p77, %p78
      %p80 = scmp.ne.s32.totalorder %s69, %s72
      %p81 = scmp.eq.s32.totalorder %s24, 1
      %p82 = por %p80, %p81
      %p83 = scmp.ne.s32.totalorder %s72, %s73
      %p84 = scmp.eq.s32.totalorder %s24, 0
      %p85 = por %p83, %p84
      %p86 = scmp.ne.s32.totalorder %s72, %s73
      %p87 = scmp.eq.s32.totalorder %s25, 1
      %p88 = por %p86, %p87
      %p90 = scmp.ne.s32.totalorder %s73, %s89
      %p91 = scmp.eq.s32.totalorder %s25, 0
      %p92 = por %p90, %p91
      %s94 = sadd.s32 %s93, 1
      %p97 = scmp.eq.s32.totalorder %s19, 1
      %p98 = scmp.ne.s32.totalorder %s93, %s95
      %p99 = scmp.eq.s32.totalorder %s19, 0
      %p100 = por %p98, %p99
      %p101 = scmp.ne.s32.totalorder %s93, %s95
      %p102 = scmp.eq.s32.totalorder %s24, 1
      %p103 = por %p101, %p102
      %p104 = scmp.ne.s32.totalorder %s95, %s96
      %p105 = scmp.eq.s32.totalorder %s24, 0
      %p106 = por %p104, %p105
      %p107 = scmp.ne.s32.totalorder %s95, %s96
      %p108 = scmp.eq.s32.totalorder %s25, 1
      %p109 = por %p107, %p108
      %p111 = scmp.ne.s32.totalorder %s96, %s110
      %p112 = scmp.eq.s32.totalorder %s25, 0
      %p113 = por %p111, %p112
      %s115 = sadd.s32 %s114, 1
      %p118 = scmp.eq.s32.totalorder %s19, 1
      %p119 = scmp.ne.s32.totalorder %s114, %s116
      %p120 = scmp.eq.s32.totalorder %s19, 0
      %p121 = por %p119, %p120
      %p122 = scmp.ne.s32.totalorder %s114, %s116
      %p123 = scmp.eq.s32.totalorder %s24, 1
      %p124 = por %p122, %p123
      %p125 = scmp.ne.s32.totalorder %s116, %s117
      %p126 = scmp.eq.s32.totalorder %s24, 0
      %p127 = por %p125, %p126
      %p128 = scmp.ne.s32.totalorder %s116, %s117
      %p129 = scmp.eq.s32.totalorder %s25, 1
      %p130 = por %p128, %p129
      %p132 = scmp.ne.s32.totalorder %s117, %s131
      %p133 = scmp.eq.s32.totalorder %s25, 0
      %p134 = por %p132, %p133
      %s136 = sadd.s32 %s135, 1
      %p139 = scmp.eq.s32.totalorder %s19, 1
      %p140 = scmp.ne.s32.totalorder %s135, %s137
      %p141 = scmp.eq.s32.totalorder %s19, 0
      %p142 = por %p140, %p141
      %p143 = scmp.ne.s32.totalorder %s135, %s137
      %p144 = scmp.eq.s32.totalorder %s24, 1
      %p145 = por %p143, %p144
      %p146 = scmp.ne.s32.totalorder %s137, %s138
      %p147 = scmp.eq.s32.totalorder %s24, 0
      %p148 = por %p146, %p147
      %p149 = scmp.ne.s32.totalorder %s137, %s138
      %p150 = scmp.eq.s32.totalorder %s25, 1
      %p151 = por %p149, %p150
      %p153 = scmp.ne.s32.totalorder %s138, %s152
      %p154 = scmp.eq.s32.totalorder %s25, 0
      %p155 = por %p153, %p154
      %s156 = ssub.s32 %s26, %s38
      %s157 = ssub.s32 %s27, %s34
      %s158 = sor.u32 %s156, %s157
      %p159 = scmp.eq.s32.totalorder %s158, 0
      %s161 = sadd.s32 %s160, 1
      %s162 = scalar_select %p159, %s160, %s161
      %p165 = pneg %p159
      %p166 = scmp.eq.s32.totalorder %s19, 1
      %p167 = por %p165, %p166
      %p168 = scmp.ne.s32.totalorder %s160, %s163
      %p169 = scmp.eq.s32.totalorder %s19, 0
      %p170 = por %p168, %p169
      %p171 = scmp.ne.s32.totalorder %s160, %s163
      %p172 = scmp.eq.s32.totalorder %s24, 1
      %p173 = por %p171, %p172
      %p174 = scmp.ne.s32.totalorder %s163, %s164
      %p175 = scmp.eq.s32.totalorder %s24, 0
      %p176 = por %p174, %p175
      %p177 = scmp.ne.s32.totalorder %s163, %s164
      %p178 = scmp.eq.s32.totalorder %s25, 1
      %p179 = por %p177, %p178
      %p181 = scmp.ne.s32.totalorder %s164, %s180
      %p182 = scmp.eq.s32.totalorder %s25, 0
      %p183 = por %p181, %p182
      %p184 = scmp.le.s32.totalorder 1, %s19
      %p185 = scmp.lt.s32.totalorder %s19, 3
      %p186 = pnand %p184, %p185
      %p187 = pneg %p186
      // Predicated region
      $region9: #{tpu_custom_call.1} parent=5 // pred_check
        _
      $region10: #{tpu_custom_call.1} parent=5 // pred_check_branch
        %189 = sbr.rel (%p186) target = $region12
      $region11: #{tpu_custom_call.1} parent=5 // pred_region
        %s190 = ssub.s32 %s19, 1
        // Predicated region
        $region13: #{tpu_custom_call.1} parent=11 // pred_check
          %p191 = pneg %p57
        $region14: #{tpu_custom_call.1} parent=11 // pred_check_branch
          %193 = sbr.rel (%p191) target = $region16
        $region15: #{tpu_custom_call.1} parent=11 // pred_region
          %s195 = ssub.s32 128, 128
          %196 = vsyncadd [#allocation3], %s195
          %s197 = smul.addr %s28, 128
          %s198 = scalar_lea.hbm %s0, %s197
          %s200 = sshll.u32 [#allocation2], 4
          %s201 = int_to_ptr.vmem [resolvable:$true] %s200
          %203 = dma.hbm_to_vmem [thread:$0]  %s198, 128, %s201, [#allocation3]
        $region16: #{tpu_custom_call.1} parent=11 // pred_fallthru
          _
        // Predicated region
        $region17: #{tpu_custom_call.1} parent=11 // pred_check
          %p204 = pneg %p106
        $region18: #{tpu_custom_call.1} parent=11 // pred_check_branch
          %206 = sbr.rel (%p204) target = $region20
        $region19: #{tpu_custom_call.1} parent=11 // pred_region
          %s208 = ssub.s32 256, 256
          %209 = vsyncadd [#allocation6], %s208
          %s210 = sshll.u32 [#allocation7], 4
          %s211 = int_to_ptr.vmem [resolvable:$true] %s210
          %216 = dma.hbm_to_vmem [thread:$0]  %s2, 256, %s211, [#allocation6], 64, 64, 4
        $region20: #{tpu_custom_call.1} parent=11 // pred_fallthru
          _
        // Predicated region
        $region21: #{tpu_custom_call.1} parent=11 // pred_check
          %p217 = pneg %p127
        $region22: #{tpu_custom_call.1} parent=11 // pred_check_branch
          %219 = sbr.rel (%p217) target = $region24
        $region23: #{tpu_custom_call.1} parent=11 // pred_region
          %s221 = ssub.s32 256, 256
          %222 = vsyncadd [#allocation9], %s221
          %s223 = sshll.u32 [#allocation8], 4
          %s224 = int_to_ptr.vmem [resolvable:$true] %s223
          %229 = dma.hbm_to_vmem [thread:$0]  %s3, 256, %s224, [#allocation9], 64, 64, 4
        $region24: #{tpu_custom_call.1} parent=11 // pred_fallthru
          _
        // Predicated region
        $region25: #{tpu_custom_call.1} parent=11 // pred_check
          %p230 = pneg %p148
        $region26: #{tpu_custom_call.1} parent=11 // pred_check_branch
          %232 = sbr.rel (%p230) target = $region28
        $region27: #{tpu_custom_call.1} parent=11 // pred_region
          %s234 = ssub.s32 64, 64
          %235 = vsyncadd [#allocation9], %s234
          %s237 = sshll.u32 [#allocation10], 4
          %s238 = int_to_ptr.vmem [resolvable:$true] %s237
          %240 = dma.hbm_to_vmem [thread:$0]  %s4, 64, %s238, [#allocation9]
        $region28: #{tpu_custom_call.1} parent=11 // pred_fallthru
          _
      $region12: #{tpu_custom_call.1} parent=5 // pred_fallthru
        _
      %p241 = scmp.lt.s32.totalorder %s19, 2
      // Predicated region
      $region29: #{tpu_custom_call.1} parent=5 // pred_check
        %p242 = pneg %p241
      $region30: #{tpu_custom_call.1} parent=5 // pred_check_branch
        %244 = sbr.rel (%p242) target = $region32
      $region31: #{tpu_custom_call.1} parent=5 // pred_region
        // Predicated region
        $region33: #{tpu_custom_call.1} parent=31 // pred_check
          %p245 = pneg %p79
        $region34: #{tpu_custom_call.1} parent=31 // pred_check_branch
          %247 = sbr.rel (%p245) target = $region36
        $region35: #{tpu_custom_call.1} parent=31 // pred_region
          %s248 = sand.u32 %s19, 1
          %s249 = scalar_lea.sflag [#allocation6], %s248
          %s250 = sand.u32 %s69, 1
          %s251 = smul.addr %s250, 4
          %s252 = scalar_lea.vmem [#allocation5], %s251
          %s254 = ssub.s32 64, 64
          %255 = vsyncadd %s249, %s254
          %s256 = sadd.s32 %s27, %s26
          %s257 = smul.addr %s256, 64
          %s258 = scalar_lea.hbm %s1, %s257
          %s260 = sshll.u32 %s252, 4
          %s261 = int_to_ptr.vmem [resolvable:$true] %s260
          %263 = dma.hbm_to_vmem [thread:$0]  %s258, 64, %s261, %s249
        $region36: #{tpu_custom_call.1} parent=31 // pred_fallthru
          _
      $region32: #{tpu_custom_call.1} parent=5 // pred_fallthru
        _
      %p264 = scmp.le.s32.totalorder 1, %s19
      %p265 = scmp.lt.s32.totalorder %s19, 3
      %p266 = pnand %p264, %p265
      %p267 = pneg %p266
      // Predicated region
      $region37: #{tpu_custom_call.1} parent=5 // pred_check
        _
      $region38: #{tpu_custom_call.1} parent=5 // pred_check_branch
        %269 = sbr.rel (%p266) target = $region40
      $region39: #{tpu_custom_call.1} parent=5 // pred_region
        %s270 = ssub.s32 %s19, 1
        // Predicated region
        $region41: #{tpu_custom_call.1} parent=39 // pred_check
          %p271 = pneg %p57
        $region42: #{tpu_custom_call.1} parent=39 // pred_check_branch
          %273 = sbr.rel (%p271) target = $region44
        $region43: #{tpu_custom_call.1} parent=39 // pred_region
          %274 = dma.done [#allocation3], 128
        $region44: #{tpu_custom_call.1} parent=39 // pred_fallthru
          _
        %s275 = sand.u32 %s24, 1
        %s276 = scalar_lea.sflag [#allocation6], %s275
        %s277 = sand.u32 %s72, 1
        %s278 = smul.addr %s277, 4
        %s279 = scalar_lea.vmem [#allocation5], %s278
        // Predicated region
        $region45: #{tpu_custom_call.1} parent=39 // pred_check
          %p280 = pneg %p85
        $region46: #{tpu_custom_call.1} parent=39 // pred_check_branch
          %282 = sbr.rel (%p280) target = $region48
        $region47: #{tpu_custom_call.1} parent=39 // pred_region
          %283 = dma.done %s276, 64
        $region48: #{tpu_custom_call.1} parent=39 // pred_fallthru
          _
        // Predicated region
        $region49: #{tpu_custom_call.1} parent=39 // pred_check
          %p284 = pneg %p106
        $region50: #{tpu_custom_call.1} parent=39 // pred_check_branch
          %286 = sbr.rel (%p284) target = $region52
        $region51: #{tpu_custom_call.1} parent=39 // pred_region
          %287 = dma.done [#allocation6], 256
        $region52: #{tpu_custom_call.1} parent=39 // pred_fallthru
          _
        // Predicated region
        $region53: #{tpu_custom_call.1} parent=39 // pred_check
          %p288 = pneg %p127
        $region54: #{tpu_custom_call.1} parent=39 // pred_check_branch
          %290 = sbr.rel (%p288) target = $region56
        $region55: #{tpu_custom_call.1} parent=39 // pred_region
          %291 = dma.done [#allocation9], 256
        $region56: #{tpu_custom_call.1} parent=39 // pred_fallthru
          _
        // Predicated region
        $region57: #{tpu_custom_call.1} parent=39 // pred_check
          %p292 = pneg %p148
        $region58: #{tpu_custom_call.1} parent=39 // pred_check_branch
          %294 = sbr.rel (%p292) target = $region60
        $region59: #{tpu_custom_call.1} parent=39 // pred_region
          %295 = dma.done [#allocation9], 64
        $region60: #{tpu_custom_call.1} parent=39 // pred_fallthru
          _
        %p296 = pneg %p57
        %p297 = pneg %p54
        %s298 = sand.u32 %s24, 1
        %s299 = scalar_lea.sflag [#allocation6], %s298
        %s300 = sand.u32 %s72, 1
        %s301 = smul.addr %s300, 4
        %s302 = scalar_lea.vmem [#allocation5], %s301
        %p303 = pneg %p85
        %p304 = pneg %p82
        %p305 = pneg %p106
        %p306 = pneg %p103
        %p307 = pneg %p127
        %p308 = pneg %p124
        %p309 = pneg %p148
        %p310 = pneg %p145
        %p311 = pneg %p176
        %p312 = pneg %p173
        %s313 = sand.u32 %s163, 1
        %s314 = scalar_lea.sflag [#allocation4], %s313
        %s315 = sand.u32 %s163, 1
        %s316 = smul.addr %s315, 8
        %s317 = scalar_lea.vmem [#allocation11], %s316
        %s319 = smul.u32 %s29, 8
        %v320 = vld [vmem:[%s279] sm:$0xf]
        %v321 = vld [vmem:[#allocation2] sm:$0xff]
        %v322 = vpack.c.bf16 %v321, %v321
        %vm323 = vcmask 64512
        %v325 = vsel %vm323, %v320, 0
        %vm327 = vcmask 1043456
        %v329 = vsel %vm327, %v322, 0
        %331 = vmatprep.subr.bf16.mxu0 0
        %332 = vmatpush1.bf16.msra.mxu0 %v329
        %333 = vmatprep.subr.bf16.mxu0 0
        %334 = vmatpush1.bf16.msra.mxu0 0
        %335 = vmatprep.subr.bf16.mxu0 0
        %336 = vmatpush1.bf16.msra.mxu0 0
        %337 = vmatprep.subr.bf16.mxu0 0
        %338 = vmatpush1.bf16.msra.mxu0 0
        %339 = vmatprep.subr.bf16.mxu0 0
        %340 = vmatpush1.bf16.msra.mxu0 0
        %341 = vmatprep.subr.bf16.mxu0 0
        %342 = vmatpush1.bf16.msra.mxu0 0
        %343 = vmatprep.subr.bf16.mxu0 0
        %344 = vmatpush1.bf16.msra.mxu0 0
        %345 = vmatprep.subr.bf16.mxu0 0
        %346 = vmatpush1.bf16.msra.mxu0 0
        %347 = vmatprep.subr.bf16.mxu0 0
        %348 = vmatpush1.bf16.msra.mxu0 0
        %349 = vmatprep.subr.bf16.mxu0 0
        %350 = vmatpush1.bf16.msra.mxu0 0
        %351 = vmatprep.subr.bf16.mxu0 0
        %352 = vmatpush1.bf16.msra.mxu0 0
        %353 = vmatprep.subr.bf16.mxu0 0
        %354 = vmatpush1.bf16.msra.mxu0 0
        %355 = vmatprep.subr.bf16.mxu0 0
        %356 = vmatpush1.bf16.msra.mxu0 0
        %357 = vmatprep.subr.bf16.mxu0 0
        %358 = vmatpush1.bf16.msra.mxu0 0
        %359 = vmatprep.subr.bf16.mxu0 0
        %360 = vmatpush1.bf16.msra.mxu0 0
        %361 = vmatprep.subr.bf16.mxu0 0
        %362 = vmatpush1.bf16.msra.mxu0 0
        %363 = vmatprep.mubr.bf16.mxu0 0
        %364 = vmatmul.mubr.bf16.gmra.mrb[0].mxu0 %v325
        %v365 = vpop.f32.mrb[0].mxu0
        %v366 = vadd.f32 0.0, %v365
        %v367 = vpop.f32.mrb[0].mxu0
        %v368 = vpop.f32.mrb[0].mxu0
        %v369 = vpop.f32.mrb[0].mxu0
        %370 = vdwg.mxu0
        %v371 = vunpack.c.l.bf16 %v320
        %v372 = vsel %vm323, %v371, 0.0
        %373 = vadd.xlane.f32.xlu0 %v372
        %v374 = vpop.xlane.xlu0 %373
        %v375 = vpack.c.bf16 %v366, %v366
        %v376 = vld [vmem:[#allocation7] sm:$0xf]
        %v377 = vld [vmem:[#allocation7 + $0x4] sm:$0xf]
        %v378 = vld [vmem:[#allocation7 + $0x8] sm:$0xf]
        %v379 = vld [vmem:[#allocation7 + $0xc] sm:$0xf]
        %v380 = vld [vmem:[#allocation10] sm:$0x1]
        %v381 = vlaneseq
        %v382 = vshrl.u32 %v381, 7
        %v383 = vsub.s32 0, %v382
        %v384 = vrot.slane %v380, %v383
        %v385 = vmul.f32 %v374, %v384
        %v390 = vunpack.c.l.b16 %v376
        %v391 = vunpack.c.l.b16 %v377
        %v392 = vunpack.c.l.b16 %v378
        %v393 = vunpack.c.l.b16 %v379
        %v394 = vpack.c.b16 %v391, %v390
        %v395 = vpack.c.b16 %v393, %v392
        %vm398 = vcmask 261120
        %v400 = vsel %vm398, %v375, 0
        %402 = vmatprep.subr.bf16.mxu0 0
        %403 = vmatpush1.bf16.msra.mxu0 %v394
        %404 = vmatprep.subr.bf16.mxu0 0
        %405 = vmatpush1.bf16.msra.mxu0 %v395
        %406 = vmatprep.subr.bf16.mxu0 0
        %407 = vmatpush1.bf16.msra.mxu0 0
        %408 = vmatprep.subr.bf16.mxu0 0
        %409 = vmatpush1.bf16.msra.mxu0 0
        %410 = vmatprep.subr.bf16.mxu0 0
        %411 = vmatpush1.bf16.msra.mxu0 0
        %412 = vmatprep.subr.bf16.mxu0 0
        %413 = vmatpush1.bf16.msra.mxu0 0
        %414 = vmatprep.subr.bf16.mxu0 0
        %415 = vmatpush1.bf16.msra.mxu0 0
        %416 = vmatprep.subr.bf16.mxu0 0
        %417 = vmatpush1.bf16.msra.mxu0 0
        %418 = vmatprep.subr.bf16.mxu0 0
        %419 = vmatpush1.bf16.msra.mxu0 0
        %420 = vmatprep.subr.bf16.mxu0 0
        %421 = vmatpush1.bf16.msra.mxu0 0
        %422 = vmatprep.subr.bf16.mxu0 0
        %423 = vmatpush1.bf16.msra.mxu0 0
        %424 = vmatprep.subr.bf16.mxu0 0
        %425 = vmatpush1.bf16.msra.mxu0 0
        %426 = vmatprep.subr.bf16.mxu0 0
        %427 = vmatpush1.bf16.msra.mxu0 0
        %428 = vmatprep.subr.bf16.mxu0 0
        %429 = vmatpush1.bf16.msra.mxu0 0
        %430 = vmatprep.subr.bf16.mxu0 0
        %431 = vmatpush1.bf16.msra.mxu0 0
        %432 = vmatprep.subr.bf16.mxu0 0
        %433 = vmatpush1.bf16.msra.mxu0 0
        %434 = vmatprep.mubr.bf16.mxu0 0
        %435 = vmatmul.mubr.bf16.gmra.mrb[0].mxu0 %v400
        %v436 = vpop.f32.mrb[0].mxu0
        %v437 = vadd.f32 %v385, %v436
        %v438 = vpop.f32.mrb[0].mxu0
        %v439 = vpop.f32.mrb[0].mxu0
        %v440 = vpop.f32.mrb[0].mxu0
        %441 = vdwg.mxu0
        %v442 = vpack.c.bf16 %v437, %v437
        %v443 = vld [vmem:[#allocation8] sm:$0xf]
        %v444 = vld [vmem:[#allocation8 + $0x4] sm:$0xf]
        %v445 = vld [vmem:[#allocation8 + $0x8] sm:$0xf]
        %v446 = vld [vmem:[#allocation8 + $0xc] sm:$0xf]
        %v447 = vld [vmem:[#allocation10 + $0x1] sm:$0x1]
        %v448 = vlaneseq
        %v449 = vshrl.u32 %v448, 7
        %v450 = vsub.s32 0, %v449
        %v451 = vrot.slane %v447, %v450
        %v456 = vunpack.c.l.b16 %v443
        %v457 = vunpack.c.l.b16 %v444
        %v458 = vunpack.c.l.b16 %v445
        %v459 = vunpack.c.l.b16 %v446
        %v460 = vpack.c.b16 %v457, %v456
        %v461 = vpack.c.b16 %v459, %v458
        %v465 = vsel %vm398, %v442, 0
        %467 = vmatprep.subr.bf16.mxu0 0
        %468 = vmatpush1.bf16.msra.mxu0 %v460
        %469 = vmatprep.subr.bf16.mxu0 0
        %470 = vmatpush1.bf16.msra.mxu0 %v461
        %471 = vmatprep.subr.bf16.mxu0 0
        %472 = vmatpush1.bf16.msra.mxu0 0
        %473 = vmatprep.subr.bf16.mxu0 0
        %474 = vmatpush1.bf16.msra.mxu0 0
        %475 = vmatprep.subr.bf16.mxu0 0
        %476 = vmatpush1.bf16.msra.mxu0 0
        %477 = vmatprep.subr.bf16.mxu0 0
        %478 = vmatpush1.bf16.msra.mxu0 0
        %479 = vmatprep.subr.bf16.mxu0 0
        %480 = vmatpush1.bf16.msra.mxu0 0
        %481 = vmatprep.subr.bf16.mxu0 0
        %482 = vmatpush1.bf16.msra.mxu0 0
        %483 = vmatprep.subr.bf16.mxu0 0
        %484 = vmatpush1.bf16.msra.mxu0 0
        %485 = vmatprep.subr.bf16.mxu0 0
        %486 = vmatpush1.bf16.msra.mxu0 0
        %487 = vmatprep.subr.bf16.mxu0 0
        %488 = vmatpush1.bf16.msra.mxu0 0
        %489 = vmatprep.subr.bf16.mxu0 0
        %490 = vmatpush1.bf16.msra.mxu0 0
        %491 = vmatprep.subr.bf16.mxu0 0
        %492 = vmatpush1.bf16.msra.mxu0 0
        %493 = vmatprep.subr.bf16.mxu0 0
        %494 = vmatpush1.bf16.msra.mxu0 0
        %495 = vmatprep.subr.bf16.mxu0 0
        %496 = vmatpush1.bf16.msra.mxu0 0
        %497 = vmatprep.subr.bf16.mxu0 0
        %498 = vmatpush1.bf16.msra.mxu0 0
        %499 = vmatprep.mubr.bf16.mxu0 0
        %500 = vmatmul.mubr.bf16.gmra.mrb[0].mxu0 %v465
        %v501 = vpop.f32.mrb[0].mxu0
        %v502 = vadd.f32 %v451, %v501
        %v503 = vpop.f32.mrb[0].mxu0
        %v504 = vpop.f32.mrb[0].mxu0
        %v505 = vpop.f32.mrb[0].mxu0
        %506 = vdwg.mxu0
        %s507 = scalar_lea.vmem [#allocation2], %s319
        %v508 = vld [vmem:[%s507] sm:$0xff]
        %v509 = vadd.f32 %v502, %v508
        %v510 = vsel %vm398, %v509, 0.0
        %511 = vadd.xlane.f32.xlu0 %v510
        %v512 = vpop.xlane.xlu0 %511
        %v513 = vrcp.pop 32.0
        %v514 = vmul.f32 %v512, %v513
        %v515 = vsub.f32 %v509, %v514
        %v516 = vmul.f32 %v515, %v515
        %v517 = vsel %vm398, %v516, 0.0
        %518 = vadd.xlane.f32.xlu0 %v517
        %v519 = vpop.xlane.xlu0 %518
        %v520 = vmul.f32 %v519, %v513
        %v521 = vadd.f32 %v520, 1e-12
        %v522 = vrsqrt.pop %v521
        %v523 = vmul.f32 %v515, %v522
        %v524 = vld [vmem:[#allocation10 + $0x2] sm:$0x1]
        %v525 = vlaneseq
        %v526 = vshrl.u32 %v525, 7
        %v527 = vsub.s32 0, %v526
        %v528 = vrot.slane %v524, %v527
        %v529 = vmul.f32 %v523, %v528
        %v530 = vld [vmem:[#allocation10 + $0x3] sm:$0x1]
        %v531 = vlaneseq
        %v532 = vshrl.u32 %v531, 7
        %v533 = vsub.s32 0, %v532
        %v534 = vrot.slane %v530, %v533
        %v535 = vadd.f32 %v529, %v534
        %536 = vst.msk [vmem:[%s317] sm:$0xff] %vm398, %v535
        %s537 = sand.u32 %s163, 1
        %s538 = scalar_lea.sflag [#allocation4], %s537
        %s539 = sand.u32 %s163, 1
        %s540 = smul.addr %s539, 8
        %s541 = scalar_lea.vmem [#allocation11], %s540
        // Predicated region
        $region61: #{tpu_custom_call.1} parent=39 // pred_check
          %p542 = pneg %p173
        $region62: #{tpu_custom_call.1} parent=39 // pred_check_branch
          %544 = sbr.rel (%p542) target = $region64
        $region63: #{tpu_custom_call.1} parent=39 // pred_region
          %s546 = ssub.s32 128, 128
          %547 = vsyncadd %s538, %s546
          %s548 = sadd.s32 %s29, %s28
          %s549 = smul.addr %s548, 128
          %s550 = scalar_lea.hbm %s5, %s549
          %s552 = sshll.u32 %s541, 4
          %s553 = int_to_ptr.vmem [resolvable:$true] %s552
          %555 = dma.vmem_to_hbm [thread:$0]  %s553, 128, %s550, %s538
        $region64: #{tpu_custom_call.1} parent=39 // pred_fallthru
          _
      $region40: #{tpu_custom_call.1} parent=5 // pred_fallthru
        _
      %p556 = scmp.le.s32.totalorder 2, %s19
      // Predicated region
      $region65: #{tpu_custom_call.1} parent=5 // pred_check
        %p557 = pneg %p556
      $region66: #{tpu_custom_call.1} parent=5 // pred_check_branch
        %559 = sbr.rel (%p557) target = $region68
      $region67: #{tpu_custom_call.1} parent=5 // pred_region
        %s560 = ssub.s32 %s19, 2
        // Predicated region
        $region69: #{tpu_custom_call.1} parent=67 // pred_check
          %p561 = pneg %p179
        $region70: #{tpu_custom_call.1} parent=67 // pred_check_branch
          %563 = sbr.rel (%p561) target = $region72
        $region71: #{tpu_custom_call.1} parent=67 // pred_region
          %s564 = sand.u32 %s164, 1
          %s565 = scalar_lea.sflag [#allocation4], %s564
          %s566 = sand.u32 %s164, 1
          %s567 = smul.addr %s566, 8
          %s568 = scalar_lea.vmem [#allocation11], %s567
          %569 = dma.done %s565, 128
        $region72: #{tpu_custom_call.1} parent=67 // pred_fallthru
          _
      $region68: #{tpu_custom_call.1} parent=5 // pred_fallthru
        _
    $region6: #{tpu_custom_call.1} parent=1 // loop_footer
      %s23 = sadd.s32 1, %s19
    $region7: #{tpu_custom_call.1} parent=1 // loop_footer_branch
      %18 = sbr.rel target = $region3
    $region8: #{tpu_custom_call.1} parent=1 // loop_exit
      _
    %570 = vsyncpa [#allocation3], 1
    %s571 = scalar_lea.sflag [#allocation3], 1
    %572 = vsyncpa %s571, 1
    %573 = vsyncpa [#allocation6], 1
    %s574 = scalar_lea.sflag [#allocation6], 1
    %575 = vsyncpa %s574, 1
    %576 = vsyncpa [#allocation9], 1
    %577 = vsyncpa [#allocation4], 1
    %s578 = scalar_lea.sflag [#allocation4], 1
    %579 = vsyncpa %s578, 1

</llo_original>
